<compile_context>
chip_gen: v7x
topology: tpu7x:2x2x1
jax: 0.10.0
libtpu: 0.0.40
codegen_flags: <defaults>
</compile_context>

<pallas_src>
import jax
import jax.numpy as jnp
from jax.experimental import pallas as pl
from jax.experimental.pallas import tpu as pltpu

# ----------------------------------------------------------------------------
# Deterministic parameters (copied from the PyTorch __init__).
# ----------------------------------------------------------------------------
_SCALE_DENOM = (
    2.01, 1.99, 1.88, 1.89, 2.01, 2.02, 2.61, 2.65, 1.89, 2.32, 2.05, 1.94,
    2.07, 1.85, 2.21, 2.06, 2.13, 2.1, 2.02, 1.93, 2.29, 2.04, 2.02, 2.07,
    4.66, 2.34, 2.18, 1.95, 1.98, 1.84, 2.01, 1.87)

_BIAS_RAW = (
    -0.12, 0.05, 0.14, 0.07, -0.15, 0.62, 0.37, 1.67, 0.11, -0.85, 0.53,
    -0.04, -0.32, 0.18, -0.14, 0.14, 0.15, 0.32, 0.47, -0.01, -0.15, 0.17,
    -0.39, -0.05, -0.29, 0.3, 0.64, 0.01, 0.15, -0.26, 0.53, 0.11)

NUM_CHANNELS = len(_SCALE_DENOM)      # 32
_LANE = 128

# Fused affine coefficients:  (x - bias) / scale  ==  x * MUL + ADD.
MUL = 2.0 * jnp.asarray(_SCALE_DENOM, dtype=jnp.float32)   # == 1 / scale
ADD = jnp.asarray(_BIAS_RAW, dtype=jnp.float32)            # == -bias / scale


# ----------------------------------------------------------------------------
# Pallas kernel: out = x * mul + add, per-channel coeffs broadcast over lanes.
# ----------------------------------------------------------------------------
def _postproc_kernel(x_ref, mul_ref, add_ref, o_ref):
    # x_ref: (1, C, TILE_HW); mul_ref/add_ref: (1, C, 1) f32.
    x = x_ref[...].astype(jnp.float32)
    o_ref[...] = (x * mul_ref[...] + add_ref[...]).astype(o_ref.dtype)


def ae_post_processing(x, *, target_tile_hw=8192):
    """x: (B, C, H, W) NCHW -> same shape/dtype, (x - bias) / scale."""
    B, C, H, W = x.shape
    assert C == NUM_CHANNELS, f"expected {NUM_CHANNELS} channels, got {C}"
    hw = H * W

    # Lane-dense spatial tiling. target_tile_hw (multiple of 128) caps each
    # block at C * tile * 4 B = 1 MiB, so in+out double-buffering stays ~4 MiB:
    # safely inside scoped VMEM on v5e (16 MiB), v6e (32 MiB) and v7x (32 MiB),
    # independent of the latent spatial size.
    assert target_tile_hw % _LANE == 0
    hw_padded = -(-hw // _LANE) * _LANE
    if hw_padded <= target_tile_hw:
        tile_hw = hw_padded                      # tiny inputs: one tile per batch
    else:
        tile_hw = target_tile_hw
        hw_padded = -(-hw // tile_hw) * tile_hw
    n_tiles = hw_padded // tile_hw

    x_flat = x.reshape(B, C, hw)
    if hw_padded != hw:
        x_flat = jnp.pad(x_flat, ((0, 0), (0, 0), (0, hw_padded - hw)))

    mul = MUL.reshape(1, C, 1)   # kept in f32 regardless of x.dtype
    add = ADD.reshape(1, C, 1)

    out = pl.pallas_call(
        _postproc_kernel,
        out_shape=jax.ShapeDtypeStruct((B, C, hw_padded), x.dtype),
        grid=(B, n_tiles),
        in_specs=[
            pl.BlockSpec((1, C, tile_hw), lambda b, t: (b, 0, t)),
            # Constant index_map -> fetched once, stays resident across grid.
            pl.BlockSpec((1, C, 1), lambda b, t: (0, 0, 0)),
            pl.BlockSpec((1, C, 1), lambda b, t: (0, 0, 0)),
        ],
        out_specs=pl.BlockSpec((1, C, tile_hw), lambda b, t: (b, 0, t)),
        compiler_params=pltpu.CompilerParams(
            dimension_semantics=("parallel", "parallel")),
        # TODO(synk): fuse this affine into the AE decoder's final kernel (or
        # alias the input via input_output_aliases at a donating call site) to
        # avoid a standalone HBM read+write round trip for 2 flops/element.
    )(x_flat, mul, add)

    if hw_padded != hw:
        out = out[:, :, :hw]
    return out.reshape(B, C, H, W)


# ----------------------------------------------------------------------------
# Independent reference: direct transcription of the PyTorch forward.
# ----------------------------------------------------------------------------
def _torch_reference(x):
    denom = jnp.asarray(_SCALE_DENOM, dtype=jnp.float32)
    scale = 0.5 / denom
    bias = -jnp.asarray(_BIAS_RAW, dtype=jnp.float32) * scale
    scale = scale.reshape(1, -1, 1, 1)
    bias = bias.reshape(1, -1, 1, 1)
    return ((x.astype(jnp.float32) - bias) / scale).astype(x.dtype)


if __name__ == "__main__":
    key0, key1 = jax.random.split(jax.random.PRNGKey(0))

    # Primary small test (lane-aligned spatial size: 16*16 = 256 = 2*128).
    B, C, H, W = 2, NUM_CHANNELS, 16, 16
    x = jax.random.normal(key0, (B, C, H, W), dtype=jnp.float32)
    y = ae_post_processing(x)
    jax.block_until_ready(y)
    assert y.shape == x.shape and y.dtype == x.dtype
    assert jnp.allclose(y, _torch_reference(x), rtol=1e-5, atol=1e-5)

    # Padding path: H*W = 100 is not a multiple of 128 -> host pad + slice.
    x2 = jax.random.normal(key1, (1, NUM_CHANNELS, 10, 10), dtype=jnp.float32)
    y2 = ae_post_processing(x2)
    jax.block_until_ready(y2)
    assert y2.shape == x2.shape and y2.dtype == x2.dtype
    assert jnp.allclose(y2, _torch_reference(x2), rtol=1e-5, atol=1e-5)

    print("KERNEL_OK")
</pallas_src>

<mosaic_0001>
module attributes {stable_mosaic.version = 11 : i64} {
  func.func @_postproc_kernel(%arg0: i32, %arg1: i32, %arg2: memref<1x32x256xf32, #tpu.memory_space<vmem>>, %arg3: memref<1x32x1xf32, #tpu.memory_space<vmem>>, %arg4: memref<1x32x1xf32, #tpu.memory_space<vmem>>, %arg5: memref<1x32x256xf32, #tpu.memory_space<vmem>>) attributes {dimension_semantics = [#tpu.dimension_semantics<parallel>, #tpu.dimension_semantics<parallel>], iteration_bounds = array<i64: 2, 1>, scalar_prefetch = 0 : i64, scratch_operands = 0 : i64, tpu.core_type = #tpu.core_type<tc>, window_params = [{transform_indices = @transform_0, window_bounds = array<i64: 1, 32, 256>}, {pipeline_mode = #tpu.pipeline_mode<synchronous>, transform_indices = @transform_1, window_bounds = array<i64: 1, 32, 1>}, {pipeline_mode = #tpu.pipeline_mode<synchronous>, transform_indices = @transform_2, window_bounds = array<i64: 1, 32, 1>}, {transform_indices = @transform_3, window_bounds = array<i64: 1, 32, 256>}]} {
    %c0 = arith.constant 0 : index
    %c0_0 = arith.constant 0 : index
    %c0_1 = arith.constant 0 : index
    %0 = vector.load %arg2[%c0, %c0_0, %c0_1] : memref<1x32x256xf32, #tpu.memory_space<vmem>>, vector<1x32x256xf32>
    %c0_2 = arith.constant 0 : index
    %c0_3 = arith.constant 0 : index
    %c0_4 = arith.constant 0 : index
    %1 = vector.load %arg3[%c0_2, %c0_3, %c0_4] : memref<1x32x1xf32, #tpu.memory_space<vmem>>, vector<1x32x1xf32>
    %2 = vector.broadcast %1 : vector<1x32x1xf32> to vector<1x32x256xf32>
    %3 = arith.mulf %0, %2 : vector<1x32x256xf32>
    %c0_5 = arith.constant 0 : index
    %c0_6 = arith.constant 0 : index
    %c0_7 = arith.constant 0 : index
    %4 = vector.load %arg4[%c0_5, %c0_6, %c0_7] : memref<1x32x1xf32, #tpu.memory_space<vmem>>, vector<1x32x1xf32>
    %5 = vector.broadcast %4 : vector<1x32x1xf32> to vector<1x32x256xf32>
    %6 = arith.addf %3, %5 : vector<1x32x256xf32>
    %c0_8 = arith.constant 0 : index
    %c0_9 = arith.constant 0 : index
    %c0_10 = arith.constant 0 : index
    %7 = vector.load %arg5[%c0_8, %c0_9, %c0_10] : memref<1x32x256xf32, #tpu.memory_space<vmem>>, vector<1x32x256xf32>
    tpu.vector_store %arg5[%c0_8, %c0_9, %c0_10], %6 {strides = array<i32>} : memref<1x32x256xf32, #tpu.memory_space<vmem>>, vector<1x32x256xf32>,
    return
  }
  func.func @transform_0(%arg0: i32, %arg1: i32) -> (i32, i32, i32) {
    %c0_i32 = arith.constant 0 : i32
    %c0_i32_0 = arith.constant 0 : i32
    return %arg0, %c0_i32, %arg1 : i32, i32, i32
  }
  func.func @transform_1(%arg0: i32, %arg1: i32) -> (i32, i32, i32) {
    %c0_i32 = arith.constant 0 : i32
    %c0_i32_0 = arith.constant 0 : i32
    %c0_i32_1 = arith.constant 0 : i32
    %c0_i32_2 = arith.constant 0 : i32
    return %c0_i32, %c0_i32_0, %c0_i32_1 : i32, i32, i32
  }
  func.func @transform_2(%arg0: i32, %arg1: i32) -> (i32, i32, i32) {
    %c0_i32 = arith.constant 0 : i32
    %c0_i32_0 = arith.constant 0 : i32
    %c0_i32_1 = arith.constant 0 : i32
    %c0_i32_2 = arith.constant 0 : i32
    return %c0_i32, %c0_i32_0, %c0_i32_1 : i32, i32, i32
  }
  func.func @transform_3(%arg0: i32, %arg1: i32) -> (i32, i32, i32) {
    %c0_i32 = arith.constant 0 : i32
    %c0_i32_0 = arith.constant 0 : i32
    return %arg0, %c0_i32, %arg1 : i32, i32, i32
  }
}

</mosaic_0001>

<llo_original>
// kernel: tpu_custom_call.1
$region0: #{tpu_custom_call.1}
  #allocation0 [shape = 'u32[]', space=smem, size = 0x4, offset = 0x4, fixed_abs, tag = 'smem constant byte address 0x4 - core index']
  #allocation1 [shape = 'u32[144,128]{1,0:T(1,128)}', space=vmem, size = 0x12000, scoped, tag = 'internal scratch']
  %s0 = inlined_call_operand.hbm [shape: f32[2,32,256], index: 0, kind: input, shape index: {}]
  %s1 = inlined_call_operand.vmem [shape: f32[1,32,1], index: 1, kind: input, shape index: {}]
  %s2 = inlined_call_operand.vmem [shape: f32[1,32,1], index: 2, kind: input, shape index: {}]
  %s3 = inlined_call_operand.hbm [shape: f32[2,32,256], index: 3, kind: output, shape index: {}]
  %s4 = sld [smem:[#allocation0]]
  $region49: #{tpu_custom_call.1} parent=0
    _
  %s6 = ssub.s32 1, %s4
  %s7 = scalar_select 0, %s6, %s4
  $region1: #{tpu_custom_call.1} parent=0
    #allocation2 [shape = 'u8[65536]{0}', space=vmem, size = 0x10000, scoped, tag = 'input window, operand 0']
    #allocation3 [shape = 's32[2]{0}', space=sflag, size = 0x8, scoped, tag = 'scoped memory for tpu_custom_call.1']
    #allocation4 [shape = 's32[2]{0}', space=sflag, size = 0x8, scoped, tag = 'scoped memory for tpu_custom_call.1']
    #allocation5 [shape = 'u8[65536]{0}', space=vmem, size = 0x10000, scoped, tag = 'output window, operand 0']
    %8 = vsyncpa [#allocation3], 0
    %s9 = scalar_lea.sflag [#allocation3], 1
    %10 = vsyncpa %s9, 0
    %11 = vsyncpa [#allocation4], 0
    %s12 = scalar_lea.sflag [#allocation4], 1
    %13 = vsyncpa %s12, 0
    loop: start=0, step=1, limit=4
    $region2: #{tpu_custom_call.1} parent=1 // loop_pre_header
      _
    $region3: #{tpu_custom_call.1} parent=1 // loop_header
      %s15 = sphi 0, %s19
      %p16 = scmp.ge.s32.totalorder %s15, 4
      %s22 = sphi 0, %s34
      %s23 = sphi 0, %s30
      %s24 = sphi 0, %s22
      %s25 = sphi 0, %s23
      %s26 = sphi 0, %s24
      %s27 = sphi 0, %s25
      %s39 = sphi 0, %s41
      %s42 = sphi 0, %s39
      %s43 = sphi 0, %s42
      %s59 = sphi 0, %s43
      %s63 = sphi 0, %s63
      %s65 = sphi 0, %s63
      %s66 = sphi 0, %s65
      %s80 = sphi 0, %s66
      %s84 = sphi 0, %s84
      %s86 = sphi 0, %s84
      %s87 = sphi 0, %s86
      %s101 = sphi 0, %s87
      %s109 = sphi 0, %s111
      %s112 = sphi 0, %s109
      %s113 = sphi 0, %s112
      %s129 = sphi 0, %s113
    $region4: #{tpu_custom_call.1} parent=1 // loop_header_branch
      %18 = sbr.rel (%p16) target = $region8
    $region5: #{tpu_custom_call.1} parent=1 // loop_body
      %s20 = ssub.s32 %s15, 1
      %s21 = ssub.s32 %s15, 2
      %s28 = sadd.s32 1, %s23
      %p29 = scmp.ge.s32.totalorder %s28, 1
      %s30 = scalar_select %p29, 0, %s28
      %s31 = sadd.s32 1, %s22
      %s32 = scalar_select %p29, %s31, %s22
      %p33 = scmp.ge.s32.totalorder %s32, 2
      %s34 = scalar_select %p33, 0, %s32
      %s35 = ssub.s32 %s22, %s34
      %s36 = ssub.s32 %s23, %s30
      %s37 = sor.u32 %s35, %s36
      %p38 = scmp.eq.s32.totalorder %s37, 0
      %s40 = sadd.s32 %s39, 1
      %s41 = scalar_select %p38, %s39, %s40
      %p44 = pneg %p38
      %p45 = scmp.eq.s32.totalorder %s15, 1
      %p46 = por %p44, %p45
      %p47 = scmp.ne.s32.totalorder %s39, %s42
      %p48 = scmp.eq.s32.totalorder %s15, 0
      %p49 = por %p47, %p48
      %p50 = scmp.ne.s32.totalorder %s39, %s42
      %p51 = scmp.eq.s32.totalorder %s20, 1
      %p52 = por %p50, %p51
      %p53 = scmp.ne.s32.totalorder %s42, %s43
      %p54 = scmp.eq.s32.totalorder %s20, 0
      %p55 = por %p53, %p54
      %p56 = scmp.ne.s32.totalorder %s42, %s43
      %p57 = scmp.eq.s32.totalorder %s21, 1
      %p58 = por %p56, %p57
      %p60 = scmp.ne.s32.totalorder %s43, %s59
      %p61 = scmp.eq.s32.totalorder %s21, 0
      %p62 = por %p60, %p61
      %s64 = sadd.s32 %s63, 1
      %p67 = scmp.eq.s32.totalorder %s15, 1
      %p68 = scmp.ne.s32.totalorder %s63, %s65
      %p69 = scmp.eq.s32.totalorder %s15, 0
      %p70 = por %p68, %p69
      %p71 = scmp.ne.s32.totalorder %s63, %s65
      %p72 = scmp.eq.s32.totalorder %s20, 1
      %p73 = por %p71, %p72
      %p74 = scmp.ne.s32.totalorder %s65, %s66
      %p75 = scmp.eq.s32.totalorder %s20, 0
      %p76 = por %p74, %p75
      %p77 = scmp.ne.s32.totalorder %s65, %s66
      %p78 = scmp.eq.s32.totalorder %s21, 1
      %p79 = por %p77, %p78
      %p81 = scmp.ne.s32.totalorder %s66, %s80
      %p82 = scmp.eq.s32.totalorder %s21, 0
      %p83 = por %p81, %p82
      %s85 = sadd.s32 %s84, 1
      %p88 = scmp.eq.s32.totalorder %s15, 1
      %p89 = scmp.ne.s32.totalorder %s84, %s86
      %p90 = scmp.eq.s32.totalorder %s15, 0
      %p91 = por %p89, %p90
      %p92 = scmp.ne.s32.totalorder %s84, %s86
      %p93 = scmp.eq.s32.totalorder %s20, 1
      %p94 = por %p92, %p93
      %p95 = scmp.ne.s32.totalorder %s86, %s87
      %p96 = scmp.eq.s32.totalorder %s20, 0
      %p97 = por %p95, %p96
      %p98 = scmp.ne.s32.totalorder %s86, %s87
      %p99 = scmp.eq.s32.totalorder %s21, 1
      %p100 = por %p98, %p99
      %p102 = scmp.ne.s32.totalorder %s87, %s101
      %p103 = scmp.eq.s32.totalorder %s21, 0
      %p104 = por %p102, %p103
      %s105 = ssub.s32 %s22, %s34
      %s106 = ssub.s32 %s23, %s30
      %s107 = sor.u32 %s105, %s106
      %p108 = scmp.eq.s32.totalorder %s107, 0
      %s110 = sadd.s32 %s109, 1
      %s111 = scalar_select %p108, %s109, %s110
      %p114 = pneg %p108
      %p115 = scmp.eq.s32.totalorder %s15, 1
      %p116 = por %p114, %p115
      %p117 = scmp.ne.s32.totalorder %s109, %s112
      %p118 = scmp.eq.s32.totalorder %s15, 0
      %p119 = por %p117, %p118
      %p120 = scmp.ne.s32.totalorder %s109, %s112
      %p121 = scmp.eq.s32.totalorder %s20, 1
      %p122 = por %p120, %p121
      %p123 = scmp.ne.s32.totalorder %s112, %s113
      %p124 = scmp.eq.s32.totalorder %s20, 0
      %p125 = por %p123, %p124
      %p126 = scmp.ne.s32.totalorder %s112, %s113
      %p127 = scmp.eq.s32.totalorder %s21, 1
      %p128 = por %p126, %p127
      %p130 = scmp.ne.s32.totalorder %s113, %s129
      %p131 = scmp.eq.s32.totalorder %s21, 0
      %p132 = por %p130, %p131
      %p133 = scmp.le.s32.totalorder 1, %s15
      %p134 = scmp.lt.s32.totalorder %s15, 3
      %p135 = pnand %p133, %p134
      %p136 = pneg %p135
      // Predicated region
      $region9: #{tpu_custom_call.1} parent=5 // pred_check
        _
      $region10: #{tpu_custom_call.1} parent=5 // pred_check_branch
        %138 = sbr.rel (%p135) target = $region12
      $region11: #{tpu_custom_call.1} parent=5 // pred_region
        %s139 = ssub.s32 %s15, 1
        // Predicated region
        $region13: #{tpu_custom_call.1} parent=11 // pred_check
          %p140 = pneg %p76
        $region14: #{tpu_custom_call.1} parent=11 // pred_check_branch
          %142 = sbr.rel (%p140) target = $region16
        $region15: #{tpu_custom_call.1} parent=11 // pred_region
          _
        $region16: #{tpu_custom_call.1} parent=11 // pred_fallthru
          _
        // Predicated region
        $region17: #{tpu_custom_call.1} parent=11 // pred_check
          %p143 = pneg %p97
        $region18: #{tpu_custom_call.1} parent=11 // pred_check_branch
          %145 = sbr.rel (%p143) target = $region20
        $region19: #{tpu_custom_call.1} parent=11 // pred_region
          _
        $region20: #{tpu_custom_call.1} parent=11 // pred_fallthru
          _
      $region12: #{tpu_custom_call.1} parent=5 // pred_fallthru
        _
      %p146 = scmp.lt.s32.totalorder %s15, 2
      // Predicated region
      $region21: #{tpu_custom_call.1} parent=5 // pred_check
        %p147 = pneg %p146
      $region22: #{tpu_custom_call.1} parent=5 // pred_check_branch
        %149 = sbr.rel (%p147) target = $region24
      $region23: #{tpu_custom_call.1} parent=5 // pred_region
        // Predicated region
        $region25: #{tpu_custom_call.1} parent=23 // pred_check
          %p150 = pneg %p49
        $region26: #{tpu_custom_call.1} parent=23 // pred_check_branch
          %152 = sbr.rel (%p150) target = $region28
        $region27: #{tpu_custom_call.1} parent=23 // pred_region
          %s153 = sand.u32 %s39, 1
          %s154 = scalar_lea.sflag [#allocation3], %s153
          %s155 = sand.u32 %s39, 1
          %s156 = smul.addr %s155, 64
          %s157 = scalar_lea.vmem [#allocation2], %s156
          %s158 = smul.u32 2, %s23
          %s160 = ssub.s32 1024, 1024
          %161 = vsyncadd %s154, %s160
          %s162 = smul.addr %s22, 8
          %s163 = sadd.s32 %s158, %s162
          %s164 = smul.addr %s163, 128
          %s165 = scalar_lea.hbm %s0, %s164
          %s166 = sshll.u32 %s157, 4
          %s167 = int_to_ptr.vmem [resolvable:$true] %s166
          %172 = dma.hbm_to_vmem [thread:$0]  %s165, 1024, %s167, %s154, 256, 256, 16
        $region28: #{tpu_custom_call.1} parent=23 // pred_fallthru
          _
      $region24: #{tpu_custom_call.1} parent=5 // pred_fallthru
        _
      %p173 = scmp.le.s32.totalorder 1, %s15
      %p174 = scmp.lt.s32.totalorder %s15, 3
      %p175 = pnand %p173, %p174
      %p176 = pneg %p175
      // Predicated region
      $region29: #{tpu_custom_call.1} parent=5 // pred_check
        _
      $region30: #{tpu_custom_call.1} parent=5 // pred_check_branch
        %178 = sbr.rel (%p175) target = $region32
      $region31: #{tpu_custom_call.1} parent=5 // pred_region
        %s179 = ssub.s32 %s15, 1
        %s180 = sand.u32 %s42, 1
        %s181 = scalar_lea.sflag [#allocation3], %s180
        %s182 = sand.u32 %s42, 1
        %s183 = smul.addr %s182, 64
        %s184 = scalar_lea.vmem [#allocation2], %s183
        // Predicated region
        $region33: #{tpu_custom_call.1} parent=31 // pred_check
          %p185 = pneg %p55
        $region34: #{tpu_custom_call.1} parent=31 // pred_check_branch
          %187 = sbr.rel (%p185) target = $region36
        $region35: #{tpu_custom_call.1} parent=31 // pred_region
          %188 = dma.done %s181, 1024
        $region36: #{tpu_custom_call.1} parent=31 // pred_fallthru
          _
        %s189 = sand.u32 %s42, 1
        %s190 = scalar_lea.sflag [#allocation3], %s189
        %s191 = sand.u32 %s42, 1
        %s192 = smul.addr %s191, 64
        %s193 = scalar_lea.vmem [#allocation2], %s192
        %p194 = pneg %p55
        %p195 = pneg %p52
        %p196 = pneg %p76
        %p197 = pneg %p73
        %p198 = pneg %p97
        %p199 = pneg %p94
        %p200 = pneg %p125
        %p201 = pneg %p122
        %s202 = sand.u32 %s112, 1
        %s203 = scalar_lea.sflag [#allocation4], %s202
        %s204 = sand.u32 %s112, 1
        %s205 = smul.addr %s204, 64
        %s206 = scalar_lea.vmem [#allocation5], %s205
        %s207 = smul.u32 2, %s25
        %s208 = smul.u32 2, %s25
        %v209 = vld [vmem:[%s184] sm:$0xff]
        %v210 = vld [vmem:[%s184 + $0x8] sm:$0xff]
        %v211 = vld [vmem:[%s184 + $0x10] sm:$0xff]
        %v212 = vld [vmem:[%s184 + $0x18] sm:$0xff]
        %v213 = vld [vmem:[%s184 + $0x20] sm:$0xff]
        %v214 = vld [vmem:[%s184 + $0x28] sm:$0xff]
        %v215 = vld [vmem:[%s184 + $0x30] sm:$0xff]
        %v216 = vld [vmem:[%s184 + $0x38] sm:$0xff]
        %v217 = vld [vmem:[%s1] sm:$0xff]
        %v218 = vld [vmem:[%s1 + $0x8] sm:$0xff]
        %v219 = vld [vmem:[%s1 + $0x10] sm:$0xff]
        %v220 = vld [vmem:[%s1 + $0x18] sm:$0xff]
        %222 = vset.pattern.permute.xlu0 0
        %223 = vperm.xlu0 %222, %v217
        %v224 = vpop.permute.xlu0 %223
        %227 = vset.pattern.permute.xlu0 0
        %228 = vperm.xlu0 %227, %v218
        %v229 = vpop.permute.xlu0 %228
        %232 = vset.pattern.permute.xlu0 0
        %233 = vperm.xlu0 %232, %v219
        %v234 = vpop.permute.xlu0 %233
        %237 = vset.pattern.permute.xlu0 0
        %238 = vperm.xlu0 %237, %v220
        %v239 = vpop.permute.xlu0 %238
        %v241 = vmul.f32 %v209, %v224
        %v242 = vmul.f32 %v210, %v224
        %v243 = vmul.f32 %v211, %v229
        %v244 = vmul.f32 %v212, %v229
        %v245 = vmul.f32 %v213, %v234
        %v246 = vmul.f32 %v214, %v234
        %v247 = vmul.f32 %v215, %v239
        %v248 = vmul.f32 %v216, %v239
        %v249 = vld [vmem:[%s2] sm:$0xff]
        %v250 = vld [vmem:[%s2 + $0x8] sm:$0xff]
        %v251 = vld [vmem:[%s2 + $0x10] sm:$0xff]
        %v252 = vld [vmem:[%s2 + $0x18] sm:$0xff]
        %254 = vset.pattern.permute.xlu0 0
        %255 = vperm.xlu0 %254, %v249
        %v256 = vpop.permute.xlu0 %255
        %259 = vset.pattern.permute.xlu0 0
        %260 = vperm.xlu0 %259, %v250
        %v261 = vpop.permute.xlu0 %260
        %264 = vset.pattern.permute.xlu0 0
        %265 = vperm.xlu0 %264, %v251
        %v266 = vpop.permute.xlu0 %265
        %269 = vset.pattern.permute.xlu0 0
        %270 = vperm.xlu0 %269, %v252
        %v271 = vpop.permute.xlu0 %270
        %v273 = vadd.f32 %v241, %v256
        %v274 = vadd.f32 %v242, %v256
        %v275 = vadd.f32 %v243, %v261
        %v276 = vadd.f32 %v244, %v261
        %v277 = vadd.f32 %v245, %v266
        %v278 = vadd.f32 %v246, %v266
        %v279 = vadd.f32 %v247, %v271
        %v280 = vadd.f32 %v248, %v271
        %281 = vst [vmem:[%s206] sm:$0xff] %v273
        %282 = vst [vmem:[%s206 + $0x8] sm:$0xff] %v274
        %283 = vst [vmem:[%s206 + $0x10] sm:$0xff] %v275
        %284 = vst [vmem:[%s206 + $0x18] sm:$0xff] %v276
        %285 = vst [vmem:[%s206 + $0x20] sm:$0xff] %v277
        %286 = vst [vmem:[%s206 + $0x28] sm:$0xff] %v278
        %287 = vst [vmem:[%s206 + $0x30] sm:$0xff] %v279
        %288 = vst [vmem:[%s206 + $0x38] sm:$0xff] %v280
        %s289 = sand.u32 %s112, 1
        %s290 = scalar_lea.sflag [#allocation4], %s289
        %s291 = sand.u32 %s112, 1
        %s292 = smul.addr %s291, 64
        %s293 = scalar_lea.vmem [#allocation5], %s292
        // Predicated region
        $region37: #{tpu_custom_call.1} parent=31 // pred_check
          %p294 = pneg %p122
        $region38: #{tpu_custom_call.1} parent=31 // pred_check_branch
          %296 = sbr.rel (%p294) target = $region40
        $region39: #{tpu_custom_call.1} parent=31 // pred_region
          %s297 = smul.u32 2, %s25
          %s299 = ssub.s32 1024, 1024
          %300 = vsyncadd %s290, %s299
          %s301 = smul.addr %s24, 8
          %s302 = sadd.s32 %s297, %s301
          %s303 = smul.addr %s302, 128
          %s304 = scalar_lea.hbm %s3, %s303
          %s305 = sshll.u32 %s293, 4
          %s306 = int_to_ptr.vmem [resolvable:$true] %s305
          %311 = dma.vmem_to_hbm [thread:$0]  %s306, 1024, %s304, %s290, 256, 256, 16
        $region40: #{tpu_custom_call.1} parent=31 // pred_fallthru
          _
      $region32: #{tpu_custom_call.1} parent=5 // pred_fallthru
        _
      %p312 = scmp.le.s32.totalorder 2, %s15
      // Predicated region
      $region41: #{tpu_custom_call.1} parent=5 // pred_check
        %p313 = pneg %p312
      $region42: #{tpu_custom_call.1} parent=5 // pred_check_branch
        %315 = sbr.rel (%p313) target = $region44
      $region43: #{tpu_custom_call.1} parent=5 // pred_region
        %s316 = ssub.s32 %s15, 2
        // Predicated region
        $region45: #{tpu_custom_call.1} parent=43 // pred_check
          %p317 = pneg %p128
        $region46: #{tpu_custom_call.1} parent=43 // pred_check_branch
          %319 = sbr.rel (%p317) target = $region48
        $region47: #{tpu_custom_call.1} parent=43 // pred_region
          %s320 = sand.u32 %s113, 1
          %s321 = scalar_lea.sflag [#allocation4], %s320
          %s322 = sand.u32 %s113, 1
          %s323 = smul.addr %s322, 64
          %s324 = scalar_lea.vmem [#allocation5], %s323
          %325 = dma.done %s321, 1024
        $region48: #{tpu_custom_call.1} parent=43 // pred_fallthru
          _
      $region44: #{tpu_custom_call.1} parent=5 // pred_fallthru
        _
    $region6: #{tpu_custom_call.1} parent=1 // loop_footer
      %s19 = sadd.s32 1, %s15
    $region7: #{tpu_custom_call.1} parent=1 // loop_footer_branch
      %14 = sbr.rel target = $region3
    $region8: #{tpu_custom_call.1} parent=1 // loop_exit
      _
    %326 = vsyncpa [#allocation3], 1
    %s327 = scalar_lea.sflag [#allocation3], 1
    %328 = vsyncpa %s327, 1
    %329 = vsyncpa [#allocation4], 1
    %s330 = scalar_lea.sflag [#allocation4], 1
    %331 = vsyncpa %s330, 1

</llo_original>
